<compile_context>
chip_gen: v5e
topology: v5e:2x2
jax: 0.10.0
libtpu: 0.0.40
codegen_flags: <defaults>
</compile_context>

<pallas_src>
import functools

import numpy as np
import jax
import jax.numpy as jnp
from jax.experimental import pallas as pl
from jax.experimental.pallas import tpu as pltpu

POOL_K = 5
POOL_S = 2
BN_EPS = 1e-5


# ---------------------------------------------------------------------------
# Kernel 1: per batch block -- ReLU -> AvgPool(5, s=2) -> Conv1x1, plus the
# per-block partial BatchNorm statistics (sum and sum-of-squares over rows).
# ---------------------------------------------------------------------------
def _stage1_kernel(x_ref, pm_ref, w1_ref, y_ref, psum_ref, psq_ref):
    """
    x_ref   : (NB*C, HW)    f32  NCHW rows (sample-major, channel-minor)
    pm_ref  : (P, HW)       bf16 0/1 pooling-window membership (exact in bf16)
    w1_ref  : (C, 128)      bf16 1x1 conv weight with 1/25 folded in
    y_ref   : (NB, P, 128)  f32  pooled+1x1-conv activations for this block
    psum_ref: (1, 1, 128)   f32  partial sum of y over (NB, P)
    psq_ref : (1, 1, 128)   f32  partial sum of y^2 over (NB, P)
    """
    NB, P, _ = y_ref.shape
    C = w1_ref.shape[0]

    pm = pm_ref[...]                       # hoisted: loaded once per block
    w1 = w1_ref[...]

    ssum = jnp.zeros((1, 128), jnp.float32)
    ssq = jnp.zeros((1, 128), jnp.float32)
    for n in range(NB):                    # static; bounded by the block size
        # Aligned sublane slice (C is a multiple of 8).
        r_n = jnp.maximum(x_ref[n * C:(n + 1) * C, :], 0.0).astype(jnp.bfloat16)
        # AvgPool as a matmul: contract HW (last dim of both operands, the
        # q @ k^T form).  pm is 0/1 so the MXU f32 accumulation is exact in HW.
        pooled = jax.lax.dot_general(
            pm, r_n, (((1,), (1,)), ((), ())),
            preferred_element_type=jnp.float32)            # (P, C)
        # Conv1x1 (with the 1/25 averaging factor pre-folded into w1).
        y_n = jnp.dot(pooled.astype(jnp.bfloat16), w1,
                      preferred_element_type=jnp.float32)  # (P, 128)
        y_ref[n] = y_n
        ssum = ssum + jnp.sum(y_n, axis=0, keepdims=True)
        ssq = ssq + jnp.sum(y_n * y_n, axis=0, keepdims=True)
    psum_ref[0] = ssum
    psq_ref[0] = ssq


# ---------------------------------------------------------------------------
# Kernel 2: per batch block -- BatchNorm (global batch stats from the partial
# sums) -> ReLU -> Conv2x2 (P accumulated matmuls) -> ReLU -> Linear.
# ---------------------------------------------------------------------------
def _stage2_kernel(y_ref, psum_ref, psq_ref, gamma_ref, beta_ref,
                   w2_ref, wc_ref, bc_ref, out_ref):
    """
    y_ref   : (NB, P, 128)        f32
    psum_ref: (n_blocks, 1, 128)  f32  per-block partial sums (full array)
    psq_ref : (n_blocks, 1, 128)  f32  per-block partial sums of squares
    gamma/beta : (1, 128)         f32
    w2_ref  : (P*128, 768)        bf16 2x2 conv, positions folded into K
    wc_ref  : (768, NCP)          bf16 classifier weight, lane-padded
    bc_ref  : (1, NCP)            f32  classifier bias, lane-padded
    out_ref : (NB, NCP)           f32  lane-padded logits
    """
    NB, P, K1 = y_ref.shape
    n_blocks = psum_ref.shape[0]
    inv_cnt = 1.0 / float(n_blocks * NB * P)

    # Combine the per-block partial statistics (tiny, f32 on the VPU).
    mean = jnp.sum(psum_ref[...], axis=0) * inv_cnt            # (1, 128)
    ex2 = jnp.sum(psq_ref[...], axis=0) * inv_cnt              # (1, 128)
    var = jnp.maximum(ex2 - mean * mean, 0.0)
    scale = gamma_ref[...] * jax.lax.rsqrt(var + BN_EPS)       # (1, 128)
    shift = beta_ref[...] - mean * scale

    # BN + ReLU on the whole block (f32 VPU math; narrow only at the MXU).
    yb = y_ref[...]                                            # (NB, P, 128)
    zb = jnp.maximum(yb * scale[None] + shift[None], 0.0)

    # Conv2d(128, 768, 2) as P accumulated MXU matmuls over 128-aligned slabs.
    acc = jnp.zeros((NB, w2_ref.shape[1]), jnp.float32)        # (NB, 768)
    for p in range(P):                                         # static P = 4
        z_p = zb[:, p, :].astype(jnp.bfloat16)                 # (NB, 128)
        acc = acc + jnp.dot(z_p, w2_ref[p * K1:(p + 1) * K1, :],
                            preferred_element_type=jnp.float32)

    # ReLU -> Linear(768, num_classes), lane-padded output (no masked stores).
    h = jnp.maximum(acc, 0.0).astype(jnp.bfloat16)
    out_ref[...] = jnp.dot(h, wc_ref[...],
                           preferred_element_type=jnp.float32) + bc_ref[...]


# ---------------------------------------------------------------------------
# Host-side constant preparation (do ONCE, cache across calls).
# ---------------------------------------------------------------------------
@functools.lru_cache(maxsize=None)
def _pool_matrix_np(h, w):
    """0/1 window-membership matrix for AvgPool2d(5, stride=2, padding=0)."""
    oh = (h - POOL_K) // POOL_S + 1
    ow = (w - POOL_K) // POOL_S + 1
    pm = np.zeros((oh * ow, h * w), np.float32)
    for i in range(oh):
        for j in range(ow):
            for kh in range(POOL_K):
                for kw in range(POOL_K):
                    pm[i * ow + j, (i * POOL_S + kh) * w + (j * POOL_S + kw)] = 1.0
    return pm


def prepare_aux_head_params(params, h, w):
    """One-time layout/dtype prep of the PyTorch-shaped params (cache this)."""
    conv1_w, bn_gamma, bn_beta, conv2_w, fc_w, fc_b = params
    oh = (h - POOL_K) // POOL_S + 1
    ow = (w - POOL_K) // POOL_S + 1
    p = oh * ow
    assert conv2_w.shape[2:] == (oh, ow), (
        "Conv2d(128, 768, 2) must reduce the pooled map to 1x1 for "
        "Linear(768, nc); input spatial must be 7 or 8.")
    num_classes = fc_w.shape[0]
    ncp = ((num_classes + 127) // 128) * 128   # lane-pad the classifier output

    pm = jnp.asarray(_pool_matrix_np(h, w), jnp.bfloat16)            # (P, HW)
    # 1x1 conv as a (C, 128) matmul weight with the 1/25 pooling factor folded.
    w1 = (jnp.transpose(conv1_w[:, :, 0, 0])
          / float(POOL_K * POOL_K)).astype(jnp.bfloat16)             # (C, 128)
    gamma = bn_gamma.reshape(1, 128).astype(jnp.float32)
    beta = bn_beta.reshape(1, 128).astype(jnp.float32)
    # 2x2 conv with kernel positions folded into the contraction dim.
    w2 = jnp.transpose(conv2_w, (2, 3, 1, 0)).reshape(p * 128, 768)
    w2 = w2.astype(jnp.bfloat16)                                     # (512, 768)
    wc = jnp.zeros((768, ncp), jnp.float32).at[:, :num_classes].set(
        jnp.transpose(fc_w)).astype(jnp.bfloat16)                    # (768, NCP)
    bc = jnp.zeros((1, ncp), jnp.float32).at[0, :num_classes].set(
        fc_b.astype(jnp.float32))
    return dict(pm=pm, w1=w1, gamma=gamma, beta=beta, w2=w2, wc=wc, bc=bc,
                num_classes=num_classes, oh=oh, ow=ow)


def aux_head_forward(x, prepped, block_n=8):
    """Forward pass.  BatchNorm uses train-mode (batch) statistics only.

    # TODO(synk): eval-mode BN (running stats) and running-stat updates are
    # PyTorch buffer side effects with no place in this pure forward.
    """
    pm, w1 = prepped["pm"], prepped["w1"]
    gamma, beta = prepped["gamma"], prepped["beta"]
    w2, wc, bc = prepped["w2"], prepped["wc"], prepped["bc"]
    num_classes = prepped["num_classes"]
    P = pm.shape[0]
    N, C, H, W = x.shape
    HW = H * W
    assert pm.shape[1] == HW and w1.shape[0] == C
    assert C % 8 == 0, "channel count must be a multiple of 8 (sublane tiling)"
    NB = min(block_n, N)
    assert N % NB == 0, "batch must be a multiple of the block size"
    n_blocks = N // NB
    ncp = wc.shape[1]

    # Free dim-collapse of the native NCHW layout (no transpose of x).
    x2 = x.reshape(N * C, HW)

    # Pass 1 (batch-parallel): pooled + 1x1-conv activations y, partial stats.
    y, psum, psq = pl.pallas_call(
        _stage1_kernel,
        grid=(n_blocks,),
        in_specs=[
            pl.BlockSpec((NB * C, HW), lambda i: (i, 0)),
            pl.BlockSpec((P, HW), lambda i: (0, 0)),
            pl.BlockSpec((C, 128), lambda i: (0, 0)),
        ],
        out_specs=(
            pl.BlockSpec((NB, P, 128), lambda i: (i, 0, 0)),
            pl.BlockSpec((1, 1, 128), lambda i: (i, 0, 0)),
            pl.BlockSpec((1, 1, 128), lambda i: (i, 0, 0)),
        ),
        out_shape=(
            jax.ShapeDtypeStruct((N, P, 128), jnp.float32),
            jax.ShapeDtypeStruct((n_blocks, 1, 128), jnp.float32),
            jax.ShapeDtypeStruct((n_blocks, 1, 128), jnp.float32),
        ),
        compiler_params=pltpu.CompilerParams(
            dimension_semantics=("parallel",)),
    )(x2, pm, w1)

    # Pass 2 (batch-parallel): BN normalize -> ReLU -> Conv2x2 -> ReLU -> FC.
    out_padded = pl.pallas_call(
        _stage2_kernel,
        grid=(n_blocks,),
        in_specs=[
            pl.BlockSpec((NB, P, 128), lambda i: (i, 0, 0)),
            pl.BlockSpec((n_blocks, 1, 128), lambda i: (0, 0, 0)),
            pl.BlockSpec((n_blocks, 1, 128), lambda i: (0, 0, 0)),
            pl.BlockSpec((1, 128), lambda i: (0, 0)),
            pl.BlockSpec((1, 128), lambda i: (0, 0)),
            pl.BlockSpec((P * 128, 768), lambda i: (0, 0)),
            pl.BlockSpec((768, ncp), lambda i: (0, 0)),
            pl.BlockSpec((1, ncp), lambda i: (0, 0)),
        ],
        out_specs=pl.BlockSpec((NB, ncp), lambda i: (i, 0)),
        out_shape=jax.ShapeDtypeStruct((N, ncp), jnp.float32),
        compiler_params=pltpu.CompilerParams(
            dimension_semantics=("parallel",)),
    )(y, psum, psq, gamma, beta, w2, wc, bc)
    return out_padded[:, :num_classes]


# ---------------------------------------------------------------------------
# Pure-JAX reference mirroring the PyTorch forward (train-mode BN, full f32).
# ---------------------------------------------------------------------------
def aux_head_reference(x, params):
    conv1_w, bn_gamma, bn_beta, conv2_w, fc_w, fc_b = params
    N, C, H, W = x.shape
    OH = (H - POOL_K) // POOL_S + 1
    OW = (W - POOL_K) // POOL_S + 1
    xr = jnp.maximum(x, 0.0)
    pooled = jnp.stack([
        jnp.stack([
            xr[:, :, oh * POOL_S:oh * POOL_S + POOL_K,
               ow * POOL_S:ow * POOL_S + POOL_K].mean(axis=(2, 3))
            for ow in range(OW)], axis=-1)
        for oh in range(OH)], axis=-2)                                 # (N,C,OH,OW)
    y = jnp.einsum('nchw,oc->nohw', pooled, conv1_w[:, :, 0, 0],
                   precision=jax.lax.Precision.HIGHEST)
    mean = y.mean(axis=(0, 2, 3), keepdims=True)
    var = ((y - mean) ** 2).mean(axis=(0, 2, 3), keepdims=True)
    y = (y - mean) * jax.lax.rsqrt(var + BN_EPS)
    y = y * bn_gamma[None, :, None, None] + bn_beta[None, :, None, None]
    y = jnp.maximum(y, 0.0)
    z = jnp.einsum('nchw,ochw->no', y, conv2_w,
                   precision=jax.lax.Precision.HIGHEST)
    z = jnp.maximum(z, 0.0)
    return jnp.dot(z, fc_w.T, precision=jax.lax.Precision.HIGHEST) + fc_b


if __name__ == "__main__":
    key = jax.random.PRNGKey(0)
    ks = jax.random.split(key, 7)

    # Small shapes consistent with the module: 8x8 spatial (-> 2x2 after the
    # 5x5/stride-2 avg-pool -> 1x1 after the 2x2 conv), C=8 channels, batch 16
    # (two blocks of 8 so the batch grid actually iterates), 10 classes.
    N, C, H, W = 16, 8, 8, 8
    num_classes = 10

    x = jax.random.normal(ks[0], (N, C, H, W), jnp.float32)
    conv1_w = 0.3 * jax.random.normal(ks[1], (128, C, 1, 1), jnp.float32)
    bn_gamma = 1.0 + 0.1 * jax.random.normal(ks[2], (128,), jnp.float32)
    bn_beta = 0.1 * jax.random.normal(ks[3], (128,), jnp.float32)
    conv2_w = 0.05 * jax.random.normal(ks[4], (768, 128, 2, 2), jnp.float32)
    fc_w = 0.05 * jax.random.normal(ks[5], (num_classes, 768), jnp.float32)
    fc_b = 0.1 * jax.random.normal(ks[6], (num_classes,), jnp.float32)
    params = (conv1_w, bn_gamma, bn_beta, conv2_w, fc_w, fc_b)

    prepped = prepare_aux_head_params(params, H, W)   # one-time prep (cached)
    out = aux_head_forward(x, prepped, block_n=8)
    jax.block_until_ready(out)

    ref = aux_head_reference(x, params)
    assert out.shape == (N, num_classes)
    max_err = float(jnp.max(jnp.abs(out - ref)))
    # Kernel runs single-pass bf16 MXU matmuls throughout; reference is full
    # f32 (HIGHEST) -> allow bf16-level tolerance.
    assert jnp.allclose(out, ref, atol=5e-2, rtol=5e-2), max_err

    print("KERNEL_OK")
</pallas_src>

<mosaic_0001>
module attributes {stable_mosaic.version = 11 : i64} {
  func.func @_stage1_kernel(%arg0: i32, %arg1: memref<64x64xf32, #tpu.memory_space<vmem>>, %arg2: memref<4x64xbf16, #tpu.memory_space<vmem>>, %arg3: memref<8x128xbf16, #tpu.memory_space<vmem>>, %arg4: memref<8x4x128xf32, #tpu.memory_space<vmem>>, %arg5: memref<1x1x128xf32, #tpu.memory_space<vmem>>, %arg6: memref<1x1x128xf32, #tpu.memory_space<vmem>>) attributes {dimension_semantics = [#tpu.dimension_semantics<parallel>], iteration_bounds = array<i64: 2>, scalar_prefetch = 0 : i64, scratch_operands = 0 : i64, tpu.core_type = #tpu.core_type<tc>, window_params = [{transform_indices = @transform_0, window_bounds = array<i64: 64, 64>}, {pipeline_mode = #tpu.pipeline_mode<synchronous>, transform_indices = @transform_1, window_bounds = array<i64: 4, 64>}, {pipeline_mode = #tpu.pipeline_mode<synchronous>, transform_indices = @transform_2, window_bounds = array<i64: 8, 128>}, {transform_indices = @transform_3, window_bounds = array<i64: 8, 4, 128>}, {transform_indices = @transform_4, window_bounds = array<i64: 1, 1, 128>}, {transform_indices = @transform_5, window_bounds = array<i64: 1, 1, 128>}]} {
    %c0 = arith.constant 0 : index
    %c0_0 = arith.constant 0 : index
    %0 = vector.load %arg2[%c0, %c0_0] : memref<4x64xbf16, #tpu.memory_space<vmem>>, vector<4x64xbf16>
    %c0_1 = arith.constant 0 : index
    %c0_2 = arith.constant 0 : index
    %1 = vector.load %arg3[%c0_1, %c0_2] : memref<8x128xbf16, #tpu.memory_space<vmem>>, vector<8x128xbf16>
    %cst = arith.constant 0.000000e+00 : f32
    %2 = vector.broadcast %cst : f32 to vector<1x128xf32>
    %cst_3 = arith.constant 0.000000e+00 : f32
    %3 = vector.broadcast %cst_3 : f32 to vector<1x128xf32>
    %c0_4 = arith.constant 0 : index
    %c0_5 = arith.constant 0 : index
    %4 = vector.load %arg1[%c0_4, %c0_5] : memref<64x64xf32, #tpu.memory_space<vmem>>, vector<8x64xf32>
    %cst_6 = arith.constant 0.000000e+00 : f32
    %5 = vector.broadcast %cst_6 : f32 to vector<8x64xf32>
    %6 = arith.maximumf %4, %5 : vector<8x64xf32>
    %7 = arith.truncf %6 : vector<8x64xf32> to vector<8x64xbf16>
    %cst_7 = arith.constant dense<0.000000e+00> : vector<4x8xf32>
    %8 = tpu.matmul %0, %7, %cst_7 {dimension_numbers = #tpu.dot_dimension_numbers<[1], [1], [0], [0], [0, 0, 1, 0], [], []>} : vector<4x64xbf16>, vector<8x64xbf16>, vector<4x8xf32> -> vector<4x8xf32>
    %9 = arith.truncf %8 : vector<4x8xf32> to vector<4x8xbf16>
    %cst_8 = arith.constant dense<0.000000e+00> : vector<4x128xf32>
    %10 = tpu.matmul %9, %1, %cst_8 {dimension_numbers = #tpu.dot_dimension_numbers<[1], [0], [0], [1], [0, 0, 1, 1], [], []>} : vector<4x8xbf16>, vector<8x128xbf16>, vector<4x128xf32> -> vector<4x128xf32>
    %c0_9 = arith.constant 0 : index
    %c0_10 = arith.constant 0 : index
    %c0_11 = arith.constant 0 : index
    %11 = vector.load %arg4[%c0_9, %c0_10, %c0_11] : memref<8x4x128xf32, #tpu.memory_space<vmem>>, vector<1x4x128xf32>
    %12 = vector.shape_cast %11 : vector<1x4x128xf32> to vector<4x128xf32>
    %13 = vector.shape_cast %10 : vector<4x128xf32> to vector<1x4x128xf32>
    tpu.vector_store %arg4[%c0_9, %c0_10, %c0_11], %13 {strides = array<i32>} : memref<8x4x128xf32, #tpu.memory_space<vmem>>, vector<1x4x128xf32>,
    %cst_12 = arith.constant dense<0.000000e+00> : vector<128xf32>
    %14 = vector.multi_reduction <add>, %10, %cst_12 [0] : vector<4x128xf32> to vector<128xf32>
    %15 = vector.shape_cast %14 : vector<128xf32> to vector<1x128xf32>
    %16 = arith.addf %2, %15 : vector<1x128xf32>
    %17 = arith.mulf %10, %10 : vector<4x128xf32>
    %cst_13 = arith.constant dense<0.000000e+00> : vector<128xf32>
    %18 = vector.multi_reduction <add>, %17, %cst_13 [0] : vector<4x128xf32> to vector<128xf32>
    %19 = vector.shape_cast %18 : vector<128xf32> to vector<1x128xf32>
    %20 = arith.addf %3, %19 : vector<1x128xf32>
    %c8 = arith.constant 8 : index
    %c0_14 = arith.constant 0 : index
    %21 = vector.load %arg1[%c8, %c0_14] : memref<64x64xf32, #tpu.memory_space<vmem>>, vector<8x64xf32>
    %cst_15 = arith.constant 0.000000e+00 : f32
    %22 = vector.broadcast %cst_15 : f32 to vector<8x64xf32>
    %23 = arith.maximumf %21, %22 : vector<8x64xf32>
    %24 = arith.truncf %23 : vector<8x64xf32> to vector<8x64xbf16>
    %cst_16 = arith.constant dense<0.000000e+00> : vector<4x8xf32>
    %25 = tpu.matmul %0, %24, %cst_16 {dimension_numbers = #tpu.dot_dimension_numbers<[1], [1], [0], [0], [0, 0, 1, 0], [], []>} : vector<4x64xbf16>, vector<8x64xbf16>, vector<4x8xf32> -> vector<4x8xf32>
    %26 = arith.truncf %25 : vector<4x8xf32> to vector<4x8xbf16>
    %cst_17 = arith.constant dense<0.000000e+00> : vector<4x128xf32>
    %27 = tpu.matmul %26, %1, %cst_17 {dimension_numbers = #tpu.dot_dimension_numbers<[1], [0], [0], [1], [0, 0, 1, 1], [], []>} : vector<4x8xbf16>, vector<8x128xbf16>, vector<4x128xf32> -> vector<4x128xf32>
    %c1 = arith.constant 1 : index
    %c0_18 = arith.constant 0 : index
    %c0_19 = arith.constant 0 : index
    %28 = vector.load %arg4[%c1, %c0_18, %c0_19] : memref<8x4x128xf32, #tpu.memory_space<vmem>>, vector<1x4x128xf32>
    %29 = vector.shape_cast %28 : vector<1x4x128xf32> to vector<4x128xf32>
    %30 = vector.shape_cast %27 : vector<4x128xf32> to vector<1x4x128xf32>
    tpu.vector_store %arg4[%c1, %c0_18, %c0_19], %30 {strides = array<i32>} : memref<8x4x128xf32, #tpu.memory_space<vmem>>, vector<1x4x128xf32>,
    %cst_20 = arith.constant dense<0.000000e+00> : vector<128xf32>
    %31 = vector.multi_reduction <add>, %27, %cst_20 [0] : vector<4x128xf32> to vector<128xf32>
    %32 = vector.shape_cast %31 : vector<128xf32> to vector<1x128xf32>
    %33 = arith.addf %16, %32 : vector<1x128xf32>
    %34 = arith.mulf %27, %27 : vector<4x128xf32>
    %cst_21 = arith.constant dense<0.000000e+00> : vector<128xf32>
    %35 = vector.multi_reduction <add>, %34, %cst_21 [0] : vector<4x128xf32> to vector<128xf32>
    %36 = vector.shape_cast %35 : vector<128xf32> to vector<1x128xf32>
    %37 = arith.addf %20, %36 : vector<1x128xf32>
    %c16 = arith.constant 16 : index
    %c0_22 = arith.constant 0 : index
    %38 = vector.load %arg1[%c16, %c0_22] : memref<64x64xf32, #tpu.memory_space<vmem>>, vector<8x64xf32>
    %cst_23 = arith.constant 0.000000e+00 : f32
    %39 = vector.broadcast %cst_23 : f32 to vector<8x64xf32>
    %40 = arith.maximumf %38, %39 : vector<8x64xf32>
    %41 = arith.truncf %40 : vector<8x64xf32> to vector<8x64xbf16>
    %cst_24 = arith.constant dense<0.000000e+00> : vector<4x8xf32>
    %42 = tpu.matmul %0, %41, %cst_24 {dimension_numbers = #tpu.dot_dimension_numbers<[1], [1], [0], [0], [0, 0, 1, 0], [], []>} : vector<4x64xbf16>, vector<8x64xbf16>, vector<4x8xf32> -> vector<4x8xf32>
    %43 = arith.truncf %42 : vector<4x8xf32> to vector<4x8xbf16>
    %cst_25 = arith.constant dense<0.000000e+00> : vector<4x128xf32>
    %44 = tpu.matmul %43, %1, %cst_25 {dimension_numbers = #tpu.dot_dimension_numbers<[1], [0], [0], [1], [0, 0, 1, 1], [], []>} : vector<4x8xbf16>, vector<8x128xbf16>, vector<4x128xf32> -> vector<4x128xf32>
    %c2 = arith.constant 2 : index
    %c0_26 = arith.constant 0 : index
    %c0_27 = arith.constant 0 : index
    %45 = vector.load %arg4[%c2, %c0_26, %c0_27] : memref<8x4x128xf32, #tpu.memory_space<vmem>>, vector<1x4x128xf32>
    %46 = vector.shape_cast %45 : vector<1x4x128xf32> to vector<4x128xf32>
    %47 = vector.shape_cast %44 : vector<4x128xf32> to vector<1x4x128xf32>
    tpu.vector_store %arg4[%c2, %c0_26, %c0_27], %47 {strides = array<i32>} : memref<8x4x128xf32, #tpu.memory_space<vmem>>, vector<1x4x128xf32>,
    %cst_28 = arith.constant dense<0.000000e+00> : vector<128xf32>
    %48 = vector.multi_reduction <add>, %44, %cst_28 [0] : vector<4x128xf32> to vector<128xf32>
    %49 = vector.shape_cast %48 : vector<128xf32> to vector<1x128xf32>
    %50 = arith.addf %33, %49 : vector<1x128xf32>
    %51 = arith.mulf %44, %44 : vector<4x128xf32>
    %cst_29 = arith.constant dense<0.000000e+00> : vector<128xf32>
    %52 = vector.multi_reduction <add>, %51, %cst_29 [0] : vector<4x128xf32> to vector<128xf32>
    %53 = vector.shape_cast %52 : vector<128xf32> to vector<1x128xf32>
    %54 = arith.addf %37, %53 : vector<1x128xf32>
    %c24 = arith.constant 24 : index
    %c0_30 = arith.constant 0 : index
    %55 = vector.load %arg1[%c24, %c0_30] : memref<64x64xf32, #tpu.memory_space<vmem>>, vector<8x64xf32>
    %cst_31 = arith.constant 0.000000e+00 : f32
    %56 = vector.broadcast %cst_31 : f32 to vector<8x64xf32>
    %57 = arith.maximumf %55, %56 : vector<8x64xf32>
    %58 = arith.truncf %57 : vector<8x64xf32> to vector<8x64xbf16>
    %cst_32 = arith.constant dense<0.000000e+00> : vector<4x8xf32>
    %59 = tpu.matmul %0, %58, %cst_32 {dimension_numbers = #tpu.dot_dimension_numbers<[1], [1], [0], [0], [0, 0, 1, 0], [], []>} : vector<4x64xbf16>, vector<8x64xbf16>, vector<4x8xf32> -> vector<4x8xf32>
    %60 = arith.truncf %59 : vector<4x8xf32> to vector<4x8xbf16>
    %cst_33 = arith.constant dense<0.000000e+00> : vector<4x128xf32>
    %61 = tpu.matmul %60, %1, %cst_33 {dimension_numbers = #tpu.dot_dimension_numbers<[1], [0], [0], [1], [0, 0, 1, 1], [], []>} : vector<4x8xbf16>, vector<8x128xbf16>, vector<4x128xf32> -> vector<4x128xf32>
    %c3 = arith.constant 3 : index
    %c0_34 = arith.constant 0 : index
    %c0_35 = arith.constant 0 : index
    %62 = vector.load %arg4[%c3, %c0_34, %c0_35] : memref<8x4x128xf32, #tpu.memory_space<vmem>>, vector<1x4x128xf32>
    %63 = vector.shape_cast %62 : vector<1x4x128xf32> to vector<4x128xf32>
    %64 = vector.shape_cast %61 : vector<4x128xf32> to vector<1x4x128xf32>
    tpu.vector_store %arg4[%c3, %c0_34, %c0_35], %64 {strides = array<i32>} : memref<8x4x128xf32, #tpu.memory_space<vmem>>, vector<1x4x128xf32>,
    %cst_36 = arith.constant dense<0.000000e+00> : vector<128xf32>
    %65 = vector.multi_reduction <add>, %61, %cst_36 [0] : vector<4x128xf32> to vector<128xf32>
    %66 = vector.shape_cast %65 : vector<128xf32> to vector<1x128xf32>
    %67 = arith.addf %50, %66 : vector<1x128xf32>
    %68 = arith.mulf %61, %61 : vector<4x128xf32>
    %cst_37 = arith.constant dense<0.000000e+00> : vector<128xf32>
    %69 = vector.multi_reduction <add>, %68, %cst_37 [0] : vector<4x128xf32> to vector<128xf32>
    %70 = vector.shape_cast %69 : vector<128xf32> to vector<1x128xf32>
    %71 = arith.addf %54, %70 : vector<1x128xf32>
    %c32 = arith.constant 32 : index
    %c0_38 = arith.constant 0 : index
    %72 = vector.load %arg1[%c32, %c0_38] : memref<64x64xf32, #tpu.memory_space<vmem>>, vector<8x64xf32>
    %cst_39 = arith.constant 0.000000e+00 : f32
    %73 = vector.broadcast %cst_39 : f32 to vector<8x64xf32>
    %74 = arith.maximumf %72, %73 : vector<8x64xf32>
    %75 = arith.truncf %74 : vector<8x64xf32> to vector<8x64xbf16>
    %cst_40 = arith.constant dense<0.000000e+00> : vector<4x8xf32>
    %76 = tpu.matmul %0, %75, %cst_40 {dimension_numbers = #tpu.dot_dimension_numbers<[1], [1], [0], [0], [0, 0, 1, 0], [], []>} : vector<4x64xbf16>, vector<8x64xbf16>, vector<4x8xf32> -> vector<4x8xf32>
    %77 = arith.truncf %76 : vector<4x8xf32> to vector<4x8xbf16>
    %cst_41 = arith.constant dense<0.000000e+00> : vector<4x128xf32>
    %78 = tpu.matmul %77, %1, %cst_41 {dimension_numbers = #tpu.dot_dimension_numbers<[1], [0], [0], [1], [0, 0, 1, 1], [], []>} : vector<4x8xbf16>, vector<8x128xbf16>, vector<4x128xf32> -> vector<4x128xf32>
    %c4 = arith.constant 4 : index
    %c0_42 = arith.constant 0 : index
    %c0_43 = arith.constant 0 : index
    %79 = vector.load %arg4[%c4, %c0_42, %c0_43] : memref<8x4x128xf32, #tpu.memory_space<vmem>>, vector<1x4x128xf32>
    %80 = vector.shape_cast %79 : vector<1x4x128xf32> to vector<4x128xf32>
    %81 = vector.shape_cast %78 : vector<4x128xf32> to vector<1x4x128xf32>
    tpu.vector_store %arg4[%c4, %c0_42, %c0_43], %81 {strides = array<i32>} : memref<8x4x128xf32, #tpu.memory_space<vmem>>, vector<1x4x128xf32>,
    %cst_44 = arith.constant dense<0.000000e+00> : vector<128xf32>
    %82 = vector.multi_reduction <add>, %78, %cst_44 [0] : vector<4x128xf32> to vector<128xf32>
    %83 = vector.shape_cast %82 : vector<128xf32> to vector<1x128xf32>
    %84 = arith.addf %67, %83 : vector<1x128xf32>
    %85 = arith.mulf %78, %78 : vector<4x128xf32>
    %cst_45 = arith.constant dense<0.000000e+00> : vector<128xf32>
    %86 = vector.multi_reduction <add>, %85, %cst_45 [0] : vector<4x128xf32> to vector<128xf32>
    %87 = vector.shape_cast %86 : vector<128xf32> to vector<1x128xf32>
    %88 = arith.addf %71, %87 : vector<1x128xf32>
    %c40 = arith.constant 40 : index
    %c0_46 = arith.constant 0 : index
    %89 = vector.load %arg1[%c40, %c0_46] : memref<64x64xf32, #tpu.memory_space<vmem>>, vector<8x64xf32>
    %cst_47 = arith.constant 0.000000e+00 : f32
    %90 = vector.broadcast %cst_47 : f32 to vector<8x64xf32>
    %91 = arith.maximumf %89, %90 : vector<8x64xf32>
    %92 = arith.truncf %91 : vector<8x64xf32> to vector<8x64xbf16>
    %cst_48 = arith.constant dense<0.000000e+00> : vector<4x8xf32>
    %93 = tpu.matmul %0, %92, %cst_48 {dimension_numbers = #tpu.dot_dimension_numbers<[1], [1], [0], [0], [0, 0, 1, 0], [], []>} : vector<4x64xbf16>, vector<8x64xbf16>, vector<4x8xf32> -> vector<4x8xf32>
    %94 = arith.truncf %93 : vector<4x8xf32> to vector<4x8xbf16>
    %cst_49 = arith.constant dense<0.000000e+00> : vector<4x128xf32>
    %95 = tpu.matmul %94, %1, %cst_49 {dimension_numbers = #tpu.dot_dimension_numbers<[1], [0], [0], [1], [0, 0, 1, 1], [], []>} : vector<4x8xbf16>, vector<8x128xbf16>, vector<4x128xf32> -> vector<4x128xf32>
    %c5 = arith.constant 5 : index
    %c0_50 = arith.constant 0 : index
    %c0_51 = arith.constant 0 : index
    %96 = vector.load %arg4[%c5, %c0_50, %c0_51] : memref<8x4x128xf32, #tpu.memory_space<vmem>>, vector<1x4x128xf32>
    %97 = vector.shape_cast %96 : vector<1x4x128xf32> to vector<4x128xf32>
    %98 = vector.shape_cast %95 : vector<4x128xf32> to vector<1x4x128xf32>
    tpu.vector_store %arg4[%c5, %c0_50, %c0_51], %98 {strides = array<i32>} : memref<8x4x128xf32, #tpu.memory_space<vmem>>, vector<1x4x128xf32>,
    %cst_52 = arith.constant dense<0.000000e+00> : vector<128xf32>
    %99 = vector.multi_reduction <add>, %95, %cst_52 [0] : vector<4x128xf32> to vector<128xf32>
    %100 = vector.shape_cast %99 : vector<128xf32> to vector<1x128xf32>
    %101 = arith.addf %84, %100 : vector<1x128xf32>
    %102 = arith.mulf %95, %95 : vector<4x128xf32>
    %cst_53 = arith.constant dense<0.000000e+00> : vector<128xf32>
    %103 = vector.multi_reduction <add>, %102, %cst_53 [0] : vector<4x128xf32> to vector<128xf32>
    %104 = vector.shape_cast %103 : vector<128xf32> to vector<1x128xf32>
    %105 = arith.addf %88, %104 : vector<1x128xf32>
    %c48 = arith.constant 48 : index
    %c0_54 = arith.constant 0 : index
    %106 = vector.load %arg1[%c48, %c0_54] : memref<64x64xf32, #tpu.memory_space<vmem>>, vector<8x64xf32>
    %cst_55 = arith.constant 0.000000e+00 : f32
    %107 = vector.broadcast %cst_55 : f32 to vector<8x64xf32>
    %108 = arith.maximumf %106, %107 : vector<8x64xf32>
    %109 = arith.truncf %108 : vector<8x64xf32> to vector<8x64xbf16>
    %cst_56 = arith.constant dense<0.000000e+00> : vector<4x8xf32>
    %110 = tpu.matmul %0, %109, %cst_56 {dimension_numbers = #tpu.dot_dimension_numbers<[1], [1], [0], [0], [0, 0, 1, 0], [], []>} : vector<4x64xbf16>, vector<8x64xbf16>, vector<4x8xf32> -> vector<4x8xf32>
    %111 = arith.truncf %110 : vector<4x8xf32> to vector<4x8xbf16>
    %cst_57 = arith.constant dense<0.000000e+00> : vector<4x128xf32>
    %112 = tpu.matmul %111, %1, %cst_57 {dimension_numbers = #tpu.dot_dimension_numbers<[1], [0], [0], [1], [0, 0, 1, 1], [], []>} : vector<4x8xbf16>, vector<8x128xbf16>, vector<4x128xf32> -> vector<4x128xf32>
    %c6 = arith.constant 6 : index
    %c0_58 = arith.constant 0 : index
    %c0_59 = arith.constant 0 : index
    %113 = vector.load %arg4[%c6, %c0_58, %c0_59] : memref<8x4x128xf32, #tpu.memory_space<vmem>>, vector<1x4x128xf32>
    %114 = vector.shape_cast %113 : vector<1x4x128xf32> to vector<4x128xf32>
    %115 = vector.shape_cast %112 : vector<4x128xf32> to vector<1x4x128xf32>
    tpu.vector_store %arg4[%c6, %c0_58, %c0_59], %115 {strides = array<i32>} : memref<8x4x128xf32, #tpu.memory_space<vmem>>, vector<1x4x128xf32>,
    %cst_60 = arith.constant dense<0.000000e+00> : vector<128xf32>
    %116 = vector.multi_reduction <add>, %112, %cst_60 [0] : vector<4x128xf32> to vector<128xf32>
    %117 = vector.shape_cast %116 : vector<128xf32> to vector<1x128xf32>
    %118 = arith.addf %101, %117 : vector<1x128xf32>
    %119 = arith.mulf %112, %112 : vector<4x128xf32>
    %cst_61 = arith.constant dense<0.000000e+00> : vector<128xf32>
    %120 = vector.multi_reduction <add>, %119, %cst_61 [0] : vector<4x128xf32> to vector<128xf32>
    %121 = vector.shape_cast %120 : vector<128xf32> to vector<1x128xf32>
    %122 = arith.addf %105, %121 : vector<1x128xf32>
    %c56 = arith.constant 56 : index
    %c0_62 = arith.constant 0 : index
    %123 = vector.load %arg1[%c56, %c0_62] : memref<64x64xf32, #tpu.memory_space<vmem>>, vector<8x64xf32>
    %cst_63 = arith.constant 0.000000e+00 : f32
    %124 = vector.broadcast %cst_63 : f32 to vector<8x64xf32>
    %125 = arith.maximumf %123, %124 : vector<8x64xf32>
    %126 = arith.truncf %125 : vector<8x64xf32> to vector<8x64xbf16>
    %cst_64 = arith.constant dense<0.000000e+00> : vector<4x8xf32>
    %127 = tpu.matmul %0, %126, %cst_64 {dimension_numbers = #tpu.dot_dimension_numbers<[1], [1], [0], [0], [0, 0, 1, 0], [], []>} : vector<4x64xbf16>, vector<8x64xbf16>, vector<4x8xf32> -> vector<4x8xf32>
    %128 = arith.truncf %127 : vector<4x8xf32> to vector<4x8xbf16>
    %cst_65 = arith.constant dense<0.000000e+00> : vector<4x128xf32>
    %129 = tpu.matmul %128, %1, %cst_65 {dimension_numbers = #tpu.dot_dimension_numbers<[1], [0], [0], [1], [0, 0, 1, 1], [], []>} : vector<4x8xbf16>, vector<8x128xbf16>, vector<4x128xf32> -> vector<4x128xf32>
    %c7 = arith.constant 7 : index
    %c0_66 = arith.constant 0 : index
    %c0_67 = arith.constant 0 : index
    %130 = vector.load %arg4[%c7, %c0_66, %c0_67] : memref<8x4x128xf32, #tpu.memory_space<vmem>>, vector<1x4x128xf32>
    %131 = vector.shape_cast %130 : vector<1x4x128xf32> to vector<4x128xf32>
    %132 = vector.shape_cast %129 : vector<4x128xf32> to vector<1x4x128xf32>
    tpu.vector_store %arg4[%c7, %c0_66, %c0_67], %132 {strides = array<i32>} : memref<8x4x128xf32, #tpu.memory_space<vmem>>, vector<1x4x128xf32>,
    %cst_68 = arith.constant dense<0.000000e+00> : vector<128xf32>
    %133 = vector.multi_reduction <add>, %129, %cst_68 [0] : vector<4x128xf32> to vector<128xf32>
    %134 = vector.shape_cast %133 : vector<128xf32> to vector<1x128xf32>
    %135 = arith.addf %118, %134 : vector<1x128xf32>
    %136 = arith.mulf %129, %129 : vector<4x128xf32>
    %cst_69 = arith.constant dense<0.000000e+00> : vector<128xf32>
    %137 = vector.multi_reduction <add>, %136, %cst_69 [0] : vector<4x128xf32> to vector<128xf32>
    %138 = vector.shape_cast %137 : vector<128xf32> to vector<1x128xf32>
    %139 = arith.addf %122, %138 : vector<1x128xf32>
    %c0_70 = arith.constant 0 : index
    %c0_71 = arith.constant 0 : index
    %c0_72 = arith.constant 0 : index
    %140 = vector.load %arg5[%c0_70, %c0_71, %c0_72] : memref<1x1x128xf32, #tpu.memory_space<vmem>>, vector<1x1x128xf32>
    %141 = vector.shape_cast %140 : vector<1x1x128xf32> to vector<1x128xf32>
    %142 = vector.shape_cast %135 : vector<1x128xf32> to vector<1x1x128xf32>
    tpu.vector_store %arg5[%c0_70, %c0_71, %c0_72], %142 {strides = array<i32>} : memref<1x1x128xf32, #tpu.memory_space<vmem>>, vector<1x1x128xf32>,
    %c0_73 = arith.constant 0 : index
    %c0_74 = arith.constant 0 : index
    %c0_75 = arith.constant 0 : index
    %143 = vector.load %arg6[%c0_73, %c0_74, %c0_75] : memref<1x1x128xf32, #tpu.memory_space<vmem>>, vector<1x1x128xf32>
    %144 = vector.shape_cast %143 : vector<1x1x128xf32> to vector<1x128xf32>
    %145 = vector.shape_cast %139 : vector<1x128xf32> to vector<1x1x128xf32>
    tpu.vector_store %arg6[%c0_73, %c0_74, %c0_75], %145 {strides = array<i32>} : memref<1x1x128xf32, #tpu.memory_space<vmem>>, vector<1x1x128xf32>,
    return
  }
  func.func @transform_0(%arg0: i32) -> (i32, i32) {
    %c0_i32 = arith.constant 0 : i32
    %c0_i32_0 = arith.constant 0 : i32
    return %arg0, %c0_i32 : i32, i32
  }
  func.func @transform_1(%arg0: i32) -> (i32, i32) {
    %c0_i32 = arith.constant 0 : i32
    %c0_i32_0 = arith.constant 0 : i32
    %c0_i32_1 = arith.constant 0 : i32
    return %c0_i32, %c0_i32_0 : i32, i32
  }
  func.func @transform_2(%arg0: i32) -> (i32, i32) {
    %c0_i32 = arith.constant 0 : i32
    %c0_i32_0 = arith.constant 0 : i32
    %c0_i32_1 = arith.constant 0 : i32
    return %c0_i32, %c0_i32_0 : i32, i32
  }
  func.func @transform_3(%arg0: i32) -> (i32, i32, i32) {
    %c0_i32 = arith.constant 0 : i32
    %c0_i32_0 = arith.constant 0 : i32
    %c0_i32_1 = arith.constant 0 : i32
    return %arg0, %c0_i32, %c0_i32_0 : i32, i32, i32
  }
  func.func @transform_4(%arg0: i32) -> (i32, i32, i32) {
    %c0_i32 = arith.constant 0 : i32
    %c0_i32_0 = arith.constant 0 : i32
    %c0_i32_1 = arith.constant 0 : i32
    return %arg0, %c0_i32, %c0_i32_0 : i32, i32, i32
  }
  func.func @transform_5(%arg0: i32) -> (i32, i32, i32) {
    %c0_i32 = arith.constant 0 : i32
    %c0_i32_0 = arith.constant 0 : i32
    %c0_i32_1 = arith.constant 0 : i32
    return %arg0, %c0_i32, %c0_i32_0 : i32, i32, i32
  }
}

</mosaic_0001>

<llo_original>
// kernel: tpu_custom_call.1
$region0: #{tpu_custom_call.1}
  #allocation0 [shape = 'u32[]', space=smem, size = 0x4, offset = 0x4, fixed_abs, tag = 'smem constant byte address 0x4 - core index']
  #allocation1 [shape = 'u32[72,128]{1,0:T(1,128)}', space=vmem, size = 0x9000, scoped, tag = 'internal scratch']
  %s0 = inlined_call_operand.vmem [shape: f32[128,64], index: 0, kind: input, shape index: {}]
  %s1 = inlined_call_operand.vmem [shape: bf16[4,64], index: 1, kind: input, shape index: {}]
  %s2 = inlined_call_operand.vmem [shape: bf16[8,128], index: 2, kind: input, shape index: {}]
  %s3 = inlined_call_operand.hbm [shape: f32[16,4,128], index: 3, kind: output, shape index: {0}]
  %s4 = inlined_call_operand.hbm [shape: f32[2,1,128], index: 4, kind: output, shape index: {1}]
  %s5 = inlined_call_operand.hbm [shape: f32[2,1,128], index: 5, kind: output, shape index: {2}]
  %6 = xla_tuple %s3, %s4, %s5
  %s7 = sld [smem:[#allocation0]]
  $region61: #{tpu_custom_call.1} parent=0
    _
  %s9 = ssub.s32 1, %s7
  %s10 = scalar_select 0, %s9, %s7
  $region1: #{tpu_custom_call.1} parent=0
    #allocation2 [shape = 'u8[32768]{0}', space=vmem, size = 0x8000, scoped, tag = 'output window, operand 0']
    #allocation3 [shape = 's32[2]{0}', space=sflag, size = 0x8, scoped, tag = 'scoped memory for tpu_custom_call.1']
    #allocation4 [shape = 'u8[1024]{0}', space=vmem, size = 0x400, scoped, tag = 'output window, operand 1']
    #allocation5 [shape = 's32[2]{0}', space=sflag, size = 0x8, scoped, tag = 'scoped memory for tpu_custom_call.1']
    #allocation6 [shape = 'u8[1024]{0}', space=vmem, size = 0x400, scoped, tag = 'output window, operand 2']
    %11 = vsyncpa [#allocation3], 0
    %s12 = scalar_lea.sflag [#allocation3], 1
    %13 = vsyncpa %s12, 0
    %14 = vsyncpa [#allocation5], 0
    %s15 = scalar_lea.sflag [#allocation5], 1
    %16 = vsyncpa %s15, 0
    loop: start=0, step=1, limit=4
    $region2: #{tpu_custom_call.1} parent=1 // loop_pre_header
      _
    $region3: #{tpu_custom_call.1} parent=1 // loop_header
      %s18 = sphi 0, %s22
      %p19 = scmp.ge.s32.totalorder %s18, 4
      %s28 = sphi 0, %s30
      %s31 = sphi 0, %s28
      %s32 = sphi 0, %s31
      %s48 = sphi 0, %s32
      %s52 = sphi 0, %s52
      %s54 = sphi 0, %s52
      %s55 = sphi 0, %s54
      %s69 = sphi 0, %s55
      %s73 = sphi 0, %s73
      %s75 = sphi 0, %s73
      %s76 = sphi 0, %s75
      %s90 = sphi 0, %s76
      %s96 = sphi 0, %s98
      %s99 = sphi 0, %s96
      %s100 = sphi 0, %s99
      %s116 = sphi 0, %s100
      %s122 = sphi 0, %s124
      %s125 = sphi 0, %s122
      %s126 = sphi 0, %s125
      %s142 = sphi 0, %s126
      %s148 = sphi 0, %s150
      %s151 = sphi 0, %s148
      %s152 = sphi 0, %s151
      %s168 = sphi 0, %s152
    $region4: #{tpu_custom_call.1} parent=1 // loop_header_branch
      %21 = sbr.rel (%p19) target = $region8
    $region5: #{tpu_custom_call.1} parent=1 // loop_body
      %s23 = ssub.s32 %s18, 1
      %s24 = ssub.s32 %s18, 2
      %s25 = sadd.s32 %s18, 1
      %s26 = ssub.s32 %s18, %s25
      %p27 = scmp.eq.s32.totalorder %s26, 0
      %s29 = sadd.s32 %s28, 1
      %s30 = scalar_select %p27, %s28, %s29
      %p33 = pneg %p27
      %p34 = scmp.eq.s32.totalorder %s18, 1
      %p35 = por %p33, %p34
      %p36 = scmp.ne.s32.totalorder %s28, %s31
      %p37 = scmp.eq.s32.totalorder %s18, 0
      %p38 = por %p36, %p37
      %p39 = scmp.ne.s32.totalorder %s28, %s31
      %p40 = scmp.eq.s32.totalorder %s23, 1
      %p41 = por %p39, %p40
      %p42 = scmp.ne.s32.totalorder %s31, %s32
      %p43 = scmp.eq.s32.totalorder %s23, 0
      %p44 = por %p42, %p43
      %p45 = scmp.ne.s32.totalorder %s31, %s32
      %p46 = scmp.eq.s32.totalorder %s24, 1
      %p47 = por %p45, %p46
      %p49 = scmp.ne.s32.totalorder %s32, %s48
      %p50 = scmp.eq.s32.totalorder %s24, 0
      %p51 = por %p49, %p50
      %s53 = sadd.s32 %s52, 1
      %p56 = scmp.eq.s32.totalorder %s18, 1
      %p57 = scmp.ne.s32.totalorder %s52, %s54
      %p58 = scmp.eq.s32.totalorder %s18, 0
      %p59 = por %p57, %p58
      %p60 = scmp.ne.s32.totalorder %s52, %s54
      %p61 = scmp.eq.s32.totalorder %s23, 1
      %p62 = por %p60, %p61
      %p63 = scmp.ne.s32.totalorder %s54, %s55
      %p64 = scmp.eq.s32.totalorder %s23, 0
      %p65 = por %p63, %p64
      %p66 = scmp.ne.s32.totalorder %s54, %s55
      %p67 = scmp.eq.s32.totalorder %s24, 1
      %p68 = por %p66, %p67
      %p70 = scmp.ne.s32.totalorder %s55, %s69
      %p71 = scmp.eq.s32.totalorder %s24, 0
      %p72 = por %p70, %p71
      %s74 = sadd.s32 %s73, 1
      %p77 = scmp.eq.s32.totalorder %s18, 1
      %p78 = scmp.ne.s32.totalorder %s73, %s75
      %p79 = scmp.eq.s32.totalorder %s18, 0
      %p80 = por %p78, %p79
      %p81 = scmp.ne.s32.totalorder %s73, %s75
      %p82 = scmp.eq.s32.totalorder %s23, 1
      %p83 = por %p81, %p82
      %p84 = scmp.ne.s32.totalorder %s75, %s76
      %p85 = scmp.eq.s32.totalorder %s23, 0
      %p86 = por %p84, %p85
      %p87 = scmp.ne.s32.totalorder %s75, %s76
      %p88 = scmp.eq.s32.totalorder %s24, 1
      %p89 = por %p87, %p88
      %p91 = scmp.ne.s32.totalorder %s76, %s90
      %p92 = scmp.eq.s32.totalorder %s24, 0
      %p93 = por %p91, %p92
      %s94 = ssub.s32 %s18, %s25
      %p95 = scmp.eq.s32.totalorder %s94, 0
      %s97 = sadd.s32 %s96, 1
      %s98 = scalar_select %p95, %s96, %s97
      %p101 = pneg %p95
      %p102 = scmp.eq.s32.totalorder %s18, 1
      %p103 = por %p101, %p102
      %p104 = scmp.ne.s32.totalorder %s96, %s99
      %p105 = scmp.eq.s32.totalorder %s18, 0
      %p106 = por %p104, %p105
      %p107 = scmp.ne.s32.totalorder %s96, %s99
      %p108 = scmp.eq.s32.totalorder %s23, 1
      %p109 = por %p107, %p108
      %p110 = scmp.ne.s32.totalorder %s99, %s100
      %p111 = scmp.eq.s32.totalorder %s23, 0
      %p112 = por %p110, %p111
      %p113 = scmp.ne.s32.totalorder %s99, %s100
      %p114 = scmp.eq.s32.totalorder %s24, 1
      %p115 = por %p113, %p114
      %p117 = scmp.ne.s32.totalorder %s100, %s116
      %p118 = scmp.eq.s32.totalorder %s24, 0
      %p119 = por %p117, %p118
      %s120 = ssub.s32 %s18, %s25
      %p121 = scmp.eq.s32.totalorder %s120, 0
      %s123 = sadd.s32 %s122, 1
      %s124 = scalar_select %p121, %s122, %s123
      %p127 = pneg %p121
      %p128 = scmp.eq.s32.totalorder %s18, 1
      %p129 = por %p127, %p128
      %p130 = scmp.ne.s32.totalorder %s122, %s125
      %p131 = scmp.eq.s32.totalorder %s18, 0
      %p132 = por %p130, %p131
      %p133 = scmp.ne.s32.totalorder %s122, %s125
      %p134 = scmp.eq.s32.totalorder %s23, 1
      %p135 = por %p133, %p134
      %p136 = scmp.ne.s32.totalorder %s125, %s126
      %p137 = scmp.eq.s32.totalorder %s23, 0
      %p138 = por %p136, %p137
      %p139 = scmp.ne.s32.totalorder %s125, %s126
      %p140 = scmp.eq.s32.totalorder %s24, 1
      %p141 = por %p139, %p140
      %p143 = scmp.ne.s32.totalorder %s126, %s142
      %p144 = scmp.eq.s32.totalorder %s24, 0
      %p145 = por %p143, %p144
      %s146 = ssub.s32 %s18, %s25
      %p147 = scmp.eq.s32.totalorder %s146, 0
      %s149 = sadd.s32 %s148, 1
      %s150 = scalar_select %p147, %s148, %s149
      %p153 = pneg %p147
      %p154 = scmp.eq.s32.totalorder %s18, 1
      %p155 = por %p153, %p154
      %p156 = scmp.ne.s32.totalorder %s148, %s151
      %p157 = scmp.eq.s32.totalorder %s18, 0
      %p158 = por %p156, %p157
      %p159 = scmp.ne.s32.totalorder %s148, %s151
      %p160 = scmp.eq.s32.totalorder %s23, 1
      %p161 = por %p159, %p160
      %p162 = scmp.ne.s32.totalorder %s151, %s152
      %p163 = scmp.eq.s32.totalorder %s23, 0
      %p164 = por %p162, %p163
      %p165 = scmp.ne.s32.totalorder %s151, %s152
      %p166 = scmp.eq.s32.totalorder %s24, 1
      %p167 = por %p165, %p166
      %p169 = scmp.ne.s32.totalorder %s152, %s168
      %p170 = scmp.eq.s32.totalorder %s24, 0
      %p171 = por %p169, %p170
      %p172 = scmp.le.s32.totalorder 1, %s18
      %p173 = scmp.lt.s32.totalorder %s18, 3
      %p174 = pnand %p172, %p173
      %p175 = pneg %p174
      // Predicated region
      $region9: #{tpu_custom_call.1} parent=5 // pred_check
        _
      $region10: #{tpu_custom_call.1} parent=5 // pred_check_branch
        %177 = sbr.rel (%p174) target = $region12
      $region11: #{tpu_custom_call.1} parent=5 // pred_region
        %s178 = ssub.s32 %s18, 1
        // Predicated region
        $region13: #{tpu_custom_call.1} parent=11 // pred_check
          %p179 = pneg %p65
        $region14: #{tpu_custom_call.1} parent=11 // pred_check_branch
          %181 = sbr.rel (%p179) target = $region16
        $region15: #{tpu_custom_call.1} parent=11 // pred_region
          _
        $region16: #{tpu_custom_call.1} parent=11 // pred_fallthru
          _
        // Predicated region
        $region17: #{tpu_custom_call.1} parent=11 // pred_check
          %p182 = pneg %p86
        $region18: #{tpu_custom_call.1} parent=11 // pred_check_branch
          %184 = sbr.rel (%p182) target = $region20
        $region19: #{tpu_custom_call.1} parent=11 // pred_region
          _
        $region20: #{tpu_custom_call.1} parent=11 // pred_fallthru
          _
      $region12: #{tpu_custom_call.1} parent=5 // pred_fallthru
        _
      %p185 = scmp.lt.s32.totalorder %s18, 2
      // Predicated region
      $region21: #{tpu_custom_call.1} parent=5 // pred_check
        %p186 = pneg %p185
      $region22: #{tpu_custom_call.1} parent=5 // pred_check_branch
        %188 = sbr.rel (%p186) target = $region24
      $region23: #{tpu_custom_call.1} parent=5 // pred_region
        // Predicated region
        $region25: #{tpu_custom_call.1} parent=23 // pred_check
          %p189 = pneg %p38
        $region26: #{tpu_custom_call.1} parent=23 // pred_check_branch
          %191 = sbr.rel (%p189) target = $region28
        $region27: #{tpu_custom_call.1} parent=23 // pred_region
          %s192 = smul.u32 8, %s18
          %p193 = scmp.lt.s32.totalorder %s192, 15
          %s194 = scalar_select %p193, %s192, 15
          %s195 = smul.addr %s194, 8
          %s196 = scalar_lea.vmem %s0, %s195
          %s197 = smul.u32 8, %s18
        $region28: #{tpu_custom_call.1} parent=23 // pred_fallthru
          _
      $region24: #{tpu_custom_call.1} parent=5 // pred_fallthru
        _
      %p198 = scmp.le.s32.totalorder 1, %s18
      %p199 = scmp.lt.s32.totalorder %s18, 3
      %p200 = pnand %p198, %p199
      %p201 = pneg %p200
      // Predicated region
      $region29: #{tpu_custom_call.1} parent=5 // pred_check
        _
      $region30: #{tpu_custom_call.1} parent=5 // pred_check_branch
        %203 = sbr.rel (%p200) target = $region32
      $region31: #{tpu_custom_call.1} parent=5 // pred_region
        %s204 = ssub.s32 %s18, 1
        %s205 = smul.u32 8, %s23
        %p206 = scmp.lt.s32.totalorder %s205, 15
        %s207 = scalar_select %p206, %s205, 15
        %s208 = smul.addr %s207, 8
        %s209 = scalar_lea.vmem %s0, %s208
        %p210 = pneg %p44
        %p211 = pneg %p41
        %p212 = pneg %p65
        %p213 = pneg %p62
        %p214 = pneg %p86
        %p215 = pneg %p83
        %p216 = pneg %p112
        %p217 = pneg %p109
        %s218 = sand.u32 %s99, 1
        %s219 = scalar_lea.sflag [#allocation3], %s218
        %s220 = sand.u32 %s99, 1
        %s221 = smul.addr %s220, 32
        %s222 = scalar_lea.vmem [#allocation2], %s221
        %p223 = pneg %p138
        %p224 = pneg %p135
        %s225 = sand.u32 %s23, 1
        %s226 = scalar_lea.sflag [#allocation5], %s225
        %s227 = sand.u32 %s125, 1
        %s228 = scalar_lea.vmem [#allocation4], %s227
        %p229 = pneg %p164
        %p230 = pneg %p161
        %s231 = sand.u32 %s23, 1
        %s232 = scalar_lea.sflag [#allocation5], %s231
        %s233 = sand.u32 %s151, 1
        %s234 = scalar_lea.vmem [#allocation6], %s233
        %s235 = smul.u32 8, %s23
        %p236 = scmp.lt.s32.totalorder %s235, 15
        %s237 = scalar_select %p236, %s235, 15
        %s238 = smul.addr %s237, 8
        %s239 = scalar_lea.vmem %s0, %s238
        %s240 = smul.u32 8, %s23
        %s241 = smul.u32 8, %s23
        %v243 = vld [vmem:[%s1] sm:$0x3]
        %v244 = vld [vmem:[%s2] sm:$0xf]
        %v245 = vld [vmem:[%s239] sm:$0xff]
        %v246 = vmax.f32 %v245, 0.0
        %v247 = vpack.c.bf16 %v246, %v246
        %vm248 = vcmask 523264
        %v250 = vsel %vm248, %v243, 0
        %v253 = vsel %vm248, %v247, 0
        %255 = vmatpush.bf16.xpose.msra.mxu0 0
        %256 = vmatpush.bf16.xpose.msra.mxu0 0
        %257 = vmatpush.bf16.xpose.msra.mxu0 0
        %258 = vmatpush.bf16.xpose.msra.mxu0 0
        %259 = vmatpush.bf16.xpose.msra.mxu0 0
        %260 = vmatpush.bf16.xpose.msra.mxu0 0
        %261 = vmatpush.bf16.xpose.msra.mxu0 0
        %262 = vmatpush.bf16.xpose.msra.mxu0 %v253
        %263 = vmatmul.bf16.gmra.mxu0 %v250
        %v264 = vpop.f32.mrf.mxu0
        %v265 = vadd.f32 0.0, %v264
        %v266 = vpop.f32.mrf.mxu0
        %267 = vdwg.mxu0
        %v268 = vpack.c.bf16 %v265, %v265
        %vm269 = vcmask 64512
        %v271 = vsel %vm269, %v268, 0
        %vm273 = vcmask 1043456
        %v275 = vsel %vm273, %v244, 0
        %277 = vmatpush.bf16.msra.mxu0 0
        %278 = vmatpush.bf16.msra.mxu0 0
        %279 = vmatpush.bf16.msra.mxu0 0
        %280 = vmatpush.bf16.msra.mxu0 0
        %281 = vmatpush.bf16.msra.mxu0 0
        %282 = vmatpush.bf16.msra.mxu0 0
        %283 = vmatpush.bf16.msra.mxu0 0
        %284 = vmatpush.bf16.msra.mxu0 %v275
        %285 = vmatmul.bf16.gmra.mxu0 %v271
        %v286 = vpop.f32.mrf.mxu0
        %v287 = vadd.f32 0.0, %v286
        %v288 = vpop.f32.mrf.mxu0
        %289 = vdwg.mxu0
        %290 = vst [vmem:[%s222] sm:$0xf] %v287
        %v291 = vsel %vm273, %v287, 0.0
        %v292 = vrot.slane %v291, 4
        %v293 = vadd.f32 %v291, %v292
        %v294 = vrot.slane %v293, 2
        %v295 = vadd.f32 %v293, %v294
        %v296 = vrot.slane %v295, 1
        %v297 = vadd.f32 %v295, %v296
        %v298 = vadd.f32 %v297, 0.0
        %v299 = vmul.f32 %v287, %v287
        %v300 = vsel %vm273, %v299, 0.0
        %v301 = vrot.slane %v300, 4
        %v302 = vadd.f32 %v300, %v301
        %v303 = vrot.slane %v302, 2
        %v304 = vadd.f32 %v302, %v303
        %v305 = vrot.slane %v304, 1
        %v306 = vadd.f32 %v304, %v305
        %v307 = vadd.f32 %v306, 0.0
        %v308 = vld [vmem:[%s239 + $0x8] sm:$0xff]
        %v309 = vmax.f32 %v308, 0.0
        %v310 = vpack.c.bf16 %v309, %v309
        %v312 = vsel %vm248, %v310, 0
        %314 = vmatpush.bf16.xpose.msra.mxu0 0
        %315 = vmatpush.bf16.xpose.msra.mxu0 0
        %316 = vmatpush.bf16.xpose.msra.mxu0 0
        %317 = vmatpush.bf16.xpose.msra.mxu0 0
        %318 = vmatpush.bf16.xpose.msra.mxu0 0
        %319 = vmatpush.bf16.xpose.msra.mxu0 0
        %320 = vmatpush.bf16.xpose.msra.mxu0 0
        %321 = vmatpush.bf16.xpose.msra.mxu0 %v312
        %322 = vmatmul.bf16.gmra.mxu0 %v250
        %v323 = vpop.f32.mrf.mxu0
        %v324 = vadd.f32 0.0, %v323
        %v325 = vpop.f32.mrf.mxu0
        %326 = vdwg.mxu0
        %v327 = vpack.c.bf16 %v324, %v324
        %v329 = vsel %vm269, %v327, 0
        %331 = vmatpush.bf16.msra.mxu0 0
        %332 = vmatpush.bf16.msra.mxu0 0
        %333 = vmatpush.bf16.msra.mxu0 0
        %334 = vmatpush.bf16.msra.mxu0 0
        %335 = vmatpush.bf16.msra.mxu0 0
        %336 = vmatpush.bf16.msra.mxu0 0
        %337 = vmatpush.bf16.msra.mxu0 0
        %338 = vmatpush.bf16.msra.mxu0 %v275
        %339 = vmatmul.bf16.gmra.mxu0 %v329
        %v340 = vpop.f32.mrf.mxu0
        %v341 = vadd.f32 0.0, %v340
        %v342 = vpop.f32.mrf.mxu0
        %343 = vdwg.mxu0
        %s344 = scalar_lea.vmem %s222, 4 [#allocation2]
        %345 = vst [vmem:[%s344] sm:$0xf] %v341
        %v346 = vsel %vm273, %v341, 0.0
        %v347 = vrot.slane %v346, 4
        %v348 = vadd.f32 %v346, %v347
        %v349 = vrot.slane %v348, 2
        %v350 = vadd.f32 %v348, %v349
        %v351 = vrot.slane %v350, 1
        %v352 = vadd.f32 %v350, %v351
        %v353 = vadd.f32 %v298, %v352
        %v354 = vmul.f32 %v341, %v341
        %v355 = vsel %vm273, %v354, 0.0
        %v356 = vrot.slane %v355, 4
        %v357 = vadd.f32 %v355, %v356
        %v358 = vrot.slane %v357, 2
        %v359 = vadd.f32 %v357, %v358
        %v360 = vrot.slane %v359, 1
        %v361 = vadd.f32 %v359, %v360
        %v362 = vadd.f32 %v307, %v361
        %v363 = vld [vmem:[%s239 + $0x10] sm:$0xff]
        %v364 = vmax.f32 %v363, 0.0
        %v365 = vpack.c.bf16 %v364, %v364
        %v367 = vsel %vm248, %v365, 0
        %369 = vmatpush.bf16.xpose.msra.mxu0 0
        %370 = vmatpush.bf16.xpose.msra.mxu0 0
        %371 = vmatpush.bf16.xpose.msra.mxu0 0
        %372 = vmatpush.bf16.xpose.msra.mxu0 0
        %373 = vmatpush.bf16.xpose.msra.mxu0 0
        %374 = vmatpush.bf16.xpose.msra.mxu0 0
        %375 = vmatpush.bf16.xpose.msra.mxu0 0
        %376 = vmatpush.bf16.xpose.msra.mxu0 %v367
        %377 = vmatmul.bf16.gmra.mxu0 %v250
        %v378 = vpop.f32.mrf.mxu0
        %v379 = vadd.f32 0.0, %v378
        %v380 = vpop.f32.mrf.mxu0
        %381 = vdwg.mxu0
        %v382 = vpack.c.bf16 %v379, %v379
        %v384 = vsel %vm269, %v382, 0
        %386 = vmatpush.bf16.msra.mxu0 0
        %387 = vmatpush.bf16.msra.mxu0 0
        %388 = vmatpush.bf16.msra.mxu0 0
        %389 = vmatpush.bf16.msra.mxu0 0
        %390 = vmatpush.bf16.msra.mxu0 0
        %391 = vmatpush.bf16.msra.mxu0 0
        %392 = vmatpush.bf16.msra.mxu0 0
        %393 = vmatpush.bf16.msra.mxu0 %v275
        %394 = vmatmul.bf16.gmra.mxu0 %v384
        %v395 = vpop.f32.mrf.mxu0
        %v396 = vadd.f32 0.0, %v395
        %v397 = vpop.f32.mrf.mxu0
        %398 = vdwg.mxu0
        %s399 = scalar_lea.vmem %s222, 8 [#allocation2]
        %400 = vst [vmem:[%s399] sm:$0xf] %v396
        %v401 = vsel %vm273, %v396, 0.0
        %v402 = vrot.slane %v401, 4
        %v403 = vadd.f32 %v401, %v402
        %v404 = vrot.slane %v403, 2
        %v405 = vadd.f32 %v403, %v404
        %v406 = vrot.slane %v405, 1
        %v407 = vadd.f32 %v405, %v406
        %v408 = vadd.f32 %v353, %v407
        %v409 = vmul.f32 %v396, %v396
        %v410 = vsel %vm273, %v409, 0.0
        %v411 = vrot.slane %v410, 4
        %v412 = vadd.f32 %v410, %v411
        %v413 = vrot.slane %v412, 2
        %v414 = vadd.f32 %v412, %v413
        %v415 = vrot.slane %v414, 1
        %v416 = vadd.f32 %v414, %v415
        %v417 = vadd.f32 %v362, %v416
        %v418 = vld [vmem:[%s239 + $0x18] sm:$0xff]
        %v419 = vmax.f32 %v418, 0.0
        %v420 = vpack.c.bf16 %v419, %v419
        %v422 = vsel %vm248, %v420, 0
        %424 = vmatpush.bf16.xpose.msra.mxu0 0
        %425 = vmatpush.bf16.xpose.msra.mxu0 0
        %426 = vmatpush.bf16.xpose.msra.mxu0 0
        %427 = vmatpush.bf16.xpose.msra.mxu0 0
        %428 = vmatpush.bf16.xpose.msra.mxu0 0
        %429 = vmatpush.bf16.xpose.msra.mxu0 0
        %430 = vmatpush.bf16.xpose.msra.mxu0 0
        %431 = vmatpush.bf16.xpose.msra.mxu0 %v422
        %432 = vmatmul.bf16.gmra.mxu0 %v250
        %v433 = vpop.f32.mrf.mxu0
        %v434 = vadd.f32 0.0, %v433
        %v435 = vpop.f32.mrf.mxu0
        %436 = vdwg.mxu0
        %v437 = vpack.c.bf16 %v434, %v434
        %v439 = vsel %vm269, %v437, 0
        %441 = vmatpush.bf16.msra.mxu0 0
        %442 = vmatpush.bf16.msra.mxu0 0
        %443 = vmatpush.bf16.msra.mxu0 0
        %444 = vmatpush.bf16.msra.mxu0 0
        %445 = vmatpush.bf16.msra.mxu0 0
        %446 = vmatpush.bf16.msra.mxu0 0
        %447 = vmatpush.bf16.msra.mxu0 0
        %448 = vmatpush.bf16.msra.mxu0 %v275
        %449 = vmatmul.bf16.gmra.mxu0 %v439
        %v450 = vpop.f32.mrf.mxu0
        %v451 = vadd.f32 0.0, %v450
        %v452 = vpop.f32.mrf.mxu0
        %453 = vdwg.mxu0
        %s454 = scalar_lea.vmem %s222, 12 [#allocation2]
        %455 = vst [vmem:[%s454] sm:$0xf] %v451
        %v456 = vsel %vm273, %v451, 0.0
        %v457 = vrot.slane %v456, 4
        %v458 = vadd.f32 %v456, %v457
        %v459 = vrot.slane %v458, 2
        %v460 = vadd.f32 %v458, %v459
        %v461 = vrot.slane %v460, 1
        %v462 = vadd.f32 %v460, %v461
        %v463 = vadd.f32 %v408, %v462
        %v464 = vmul.f32 %v451, %v451
        %v465 = vsel %vm273, %v464, 0.0
        %v466 = vrot.slane %v465, 4
        %v467 = vadd.f32 %v465, %v466
        %v468 = vrot.slane %v467, 2
        %v469 = vadd.f32 %v467, %v468
        %v470 = vrot.slane %v469, 1
        %v471 = vadd.f32 %v469, %v470
        %v472 = vadd.f32 %v417, %v471
        %v473 = vld [vmem:[%s239 + $0x20] sm:$0xff]
        %v474 = vmax.f32 %v473, 0.0
        %v475 = vpack.c.bf16 %v474, %v474
        %v477 = vsel %vm248, %v475, 0
        %479 = vmatpush.bf16.xpose.msra.mxu0 0
        %480 = vmatpush.bf16.xpose.msra.mxu0 0
        %481 = vmatpush.bf16.xpose.msra.mxu0 0
        %482 = vmatpush.bf16.xpose.msra.mxu0 0
        %483 = vmatpush.bf16.xpose.msra.mxu0 0
        %484 = vmatpush.bf16.xpose.msra.mxu0 0
        %485 = vmatpush.bf16.xpose.msra.mxu0 0
        %486 = vmatpush.bf16.xpose.msra.mxu0 %v477
        %487 = vmatmul.bf16.gmra.mxu0 %v250
        %v488 = vpop.f32.mrf.mxu0
        %v489 = vadd.f32 0.0, %v488
        %v490 = vpop.f32.mrf.mxu0
        %491 = vdwg.mxu0
        %v492 = vpack.c.bf16 %v489, %v489
        %v494 = vsel %vm269, %v492, 0
        %496 = vmatpush.bf16.msra.mxu0 0
        %497 = vmatpush.bf16.msra.mxu0 0
        %498 = vmatpush.bf16.msra.mxu0 0
        %499 = vmatpush.bf16.msra.mxu0 0
        %500 = vmatpush.bf16.msra.mxu0 0
        %501 = vmatpush.bf16.msra.mxu0 0
        %502 = vmatpush.bf16.msra.mxu0 0
        %503 = vmatpush.bf16.msra.mxu0 %v275
        %504 = vmatmul.bf16.gmra.mxu0 %v494
        %v505 = vpop.f32.mrf.mxu0
        %v506 = vadd.f32 0.0, %v505
        %v507 = vpop.f32.mrf.mxu0
        %508 = vdwg.mxu0
        %s509 = scalar_lea.vmem %s222, 16 [#allocation2]
        %510 = vst [vmem:[%s509] sm:$0xf] %v506
        %v511 = vsel %vm273, %v506, 0.0
        %v512 = vrot.slane %v511, 4
        %v513 = vadd.f32 %v511, %v512
        %v514 = vrot.slane %v513, 2
        %v515 = vadd.f32 %v513, %v514
        %v516 = vrot.slane %v515, 1
        %v517 = vadd.f32 %v515, %v516
        %v518 = vadd.f32 %v463, %v517
        %v519 = vmul.f32 %v506, %v506
        %v520 = vsel %vm273, %v519, 0.0
        %v521 = vrot.slane %v520, 4
        %v522 = vadd.f32 %v520, %v521
        %v523 = vrot.slane %v522, 2
        %v524 = vadd.f32 %v522, %v523
        %v525 = vrot.slane %v524, 1
        %v526 = vadd.f32 %v524, %v525
        %v527 = vadd.f32 %v472, %v526
        %v528 = vld [vmem:[%s239 + $0x28] sm:$0xff]
        %v529 = vmax.f32 %v528, 0.0
        %v530 = vpack.c.bf16 %v529, %v529
        %v532 = vsel %vm248, %v530, 0
        %534 = vmatpush.bf16.xpose.msra.mxu0 0
        %535 = vmatpush.bf16.xpose.msra.mxu0 0
        %536 = vmatpush.bf16.xpose.msra.mxu0 0
        %537 = vmatpush.bf16.xpose.msra.mxu0 0
        %538 = vmatpush.bf16.xpose.msra.mxu0 0
        %539 = vmatpush.bf16.xpose.msra.mxu0 0
        %540 = vmatpush.bf16.xpose.msra.mxu0 0
        %541 = vmatpush.bf16.xpose.msra.mxu0 %v532
        %542 = vmatmul.bf16.gmra.mxu0 %v250
        %v543 = vpop.f32.mrf.mxu0
        %v544 = vadd.f32 0.0, %v543
        %v545 = vpop.f32.mrf.mxu0
        %546 = vdwg.mxu0
        %v547 = vpack.c.bf16 %v544, %v544
        %v549 = vsel %vm269, %v547, 0
        %551 = vmatpush.bf16.msra.mxu0 0
        %552 = vmatpush.bf16.msra.mxu0 0
        %553 = vmatpush.bf16.msra.mxu0 0
        %554 = vmatpush.bf16.msra.mxu0 0
        %555 = vmatpush.bf16.msra.mxu0 0
        %556 = vmatpush.bf16.msra.mxu0 0
        %557 = vmatpush.bf16.msra.mxu0 0
        %558 = vmatpush.bf16.msra.mxu0 %v275
        %559 = vmatmul.bf16.gmra.mxu0 %v549
        %v560 = vpop.f32.mrf.mxu0
        %v561 = vadd.f32 0.0, %v560
        %v562 = vpop.f32.mrf.mxu0
        %563 = vdwg.mxu0
        %s564 = scalar_lea.vmem %s222, 20 [#allocation2]
        %565 = vst [vmem:[%s564] sm:$0xf] %v561
        %v566 = vsel %vm273, %v561, 0.0
        %v567 = vrot.slane %v566, 4
        %v568 = vadd.f32 %v566, %v567
        %v569 = vrot.slane %v568, 2
        %v570 = vadd.f32 %v568, %v569
        %v571 = vrot.slane %v570, 1
        %v572 = vadd.f32 %v570, %v571
        %v573 = vadd.f32 %v518, %v572
        %v574 = vmul.f32 %v561, %v561
        %v575 = vsel %vm273, %v574, 0.0
        %v576 = vrot.slane %v575, 4
        %v577 = vadd.f32 %v575, %v576
        %v578 = vrot.slane %v577, 2
        %v579 = vadd.f32 %v577, %v578
        %v580 = vrot.slane %v579, 1
        %v581 = vadd.f32 %v579, %v580
        %v582 = vadd.f32 %v527, %v581
        %v583 = vld [vmem:[%s239 + $0x30] sm:$0xff]
        %v584 = vmax.f32 %v583, 0.0
        %v585 = vpack.c.bf16 %v584, %v584
        %v587 = vsel %vm248, %v585, 0
        %589 = vmatpush.bf16.xpose.msra.mxu0 0
        %590 = vmatpush.bf16.xpose.msra.mxu0 0
        %591 = vmatpush.bf16.xpose.msra.mxu0 0
        %592 = vmatpush.bf16.xpose.msra.mxu0 0
        %593 = vmatpush.bf16.xpose.msra.mxu0 0
        %594 = vmatpush.bf16.xpose.msra.mxu0 0
        %595 = vmatpush.bf16.xpose.msra.mxu0 0
        %596 = vmatpush.bf16.xpose.msra.mxu0 %v587
        %597 = vmatmul.bf16.gmra.mxu0 %v250
        %v598 = vpop.f32.mrf.mxu0
        %v599 = vadd.f32 0.0, %v598
        %v600 = vpop.f32.mrf.mxu0
        %601 = vdwg.mxu0
        %v602 = vpack.c.bf16 %v599, %v599
        %v604 = vsel %vm269, %v602, 0
        %606 = vmatpush.bf16.msra.mxu0 0
        %607 = vmatpush.bf16.msra.mxu0 0
        %608 = vmatpush.bf16.msra.mxu0 0
        %609 = vmatpush.bf16.msra.mxu0 0
        %610 = vmatpush.bf16.msra.mxu0 0
        %611 = vmatpush.bf16.msra.mxu0 0
        %612 = vmatpush.bf16.msra.mxu0 0
        %613 = vmatpush.bf16.msra.mxu0 %v275
        %614 = vmatmul.bf16.gmra.mxu0 %v604
        %v615 = vpop.f32.mrf.mxu0
        %v616 = vadd.f32 0.0, %v615
        %v617 = vpop.f32.mrf.mxu0
        %618 = vdwg.mxu0
        %s619 = scalar_lea.vmem %s222, 24 [#allocation2]
        %620 = vst [vmem:[%s619] sm:$0xf] %v616
        %v621 = vsel %vm273, %v616, 0.0
        %v622 = vrot.slane %v621, 4
        %v623 = vadd.f32 %v621, %v622
        %v624 = vrot.slane %v623, 2
        %v625 = vadd.f32 %v623, %v624
        %v626 = vrot.slane %v625, 1
        %v627 = vadd.f32 %v625, %v626
        %v628 = vadd.f32 %v573, %v627
        %v629 = vmul.f32 %v616, %v616
        %v630 = vsel %vm273, %v629, 0.0
        %v631 = vrot.slane %v630, 4
        %v632 = vadd.f32 %v630, %v631
        %v633 = vrot.slane %v632, 2
        %v634 = vadd.f32 %v632, %v633
        %v635 = vrot.slane %v634, 1
        %v636 = vadd.f32 %v634, %v635
        %v637 = vadd.f32 %v582, %v636
        %v638 = vld [vmem:[%s239 + $0x38] sm:$0xff]
        %v639 = vmax.f32 %v638, 0.0
        %v640 = vpack.c.bf16 %v639, %v639
        %v642 = vsel %vm248, %v640, 0
        %644 = vmatpush.bf16.xpose.msra.mxu0 0
        %645 = vmatpush.bf16.xpose.msra.mxu0 0
        %646 = vmatpush.bf16.xpose.msra.mxu0 0
        %647 = vmatpush.bf16.xpose.msra.mxu0 0
        %648 = vmatpush.bf16.xpose.msra.mxu0 0
        %649 = vmatpush.bf16.xpose.msra.mxu0 0
        %650 = vmatpush.bf16.xpose.msra.mxu0 0
        %651 = vmatpush.bf16.xpose.msra.mxu0 %v642
        %652 = vmatmul.bf16.gmra.mxu0 %v250
        %v653 = vpop.f32.mrf.mxu0
        %v654 = vadd.f32 0.0, %v653
        %v655 = vpop.f32.mrf.mxu0
        %656 = vdwg.mxu0
        %v657 = vpack.c.bf16 %v654, %v654
        %v659 = vsel %vm269, %v657, 0
        %661 = vmatpush.bf16.msra.mxu0 0
        %662 = vmatpush.bf16.msra.mxu0 0
        %663 = vmatpush.bf16.msra.mxu0 0
        %664 = vmatpush.bf16.msra.mxu0 0
        %665 = vmatpush.bf16.msra.mxu0 0
        %666 = vmatpush.bf16.msra.mxu0 0
        %667 = vmatpush.bf16.msra.mxu0 0
        %668 = vmatpush.bf16.msra.mxu0 %v275
        %669 = vmatmul.bf16.gmra.mxu0 %v659
        %v670 = vpop.f32.mrf.mxu0
        %v671 = vadd.f32 0.0, %v670
        %v672 = vpop.f32.mrf.mxu0
        %673 = vdwg.mxu0
        %s674 = scalar_lea.vmem %s222, 28 [#allocation2]
        %675 = vst [vmem:[%s674] sm:$0xf] %v671
        %v676 = vsel %vm273, %v671, 0.0
        %v677 = vrot.slane %v676, 4
        %v678 = vadd.f32 %v676, %v677
        %v679 = vrot.slane %v678, 2
        %v680 = vadd.f32 %v678, %v679
        %v681 = vrot.slane %v680, 1
        %v682 = vadd.f32 %v680, %v681
        %v683 = vadd.f32 %v628, %v682
        %v684 = vmul.f32 %v671, %v671
        %v685 = vsel %vm273, %v684, 0.0
        %v686 = vrot.slane %v685, 4
        %v687 = vadd.f32 %v685, %v686
        %v688 = vrot.slane %v687, 2
        %v689 = vadd.f32 %v687, %v688
        %v690 = vrot.slane %v689, 1
        %v691 = vadd.f32 %v689, %v690
        %v692 = vadd.f32 %v637, %v691
        %693 = vst [vmem:[%s228] sm:$0x1] %v683
        %694 = vst [vmem:[%s234] sm:$0x1] %v692
        %s695 = sand.u32 %s99, 1
        %s696 = scalar_lea.sflag [#allocation3], %s695
        %s697 = sand.u32 %s99, 1
        %s698 = smul.addr %s697, 32
        %s699 = scalar_lea.vmem [#allocation2], %s698
        %s700 = sand.u32 %s23, 1
        %s701 = scalar_lea.sflag [#allocation5], %s700
        %s702 = sand.u32 %s125, 1
        %s703 = scalar_lea.vmem [#allocation4], %s702
        %s704 = sand.u32 %s23, 1
        %s705 = scalar_lea.sflag [#allocation5], %s704
        %s706 = sand.u32 %s151, 1
        %s707 = scalar_lea.vmem [#allocation6], %s706
        // Predicated region
        $region33: #{tpu_custom_call.1} parent=31 // pred_check
          %p708 = pneg %p109
        $region34: #{tpu_custom_call.1} parent=31 // pred_check_branch
          %710 = sbr.rel (%p708) target = $region36
        $region35: #{tpu_custom_call.1} parent=31 // pred_region
          %s711 = smul.u32 8, %s23
          %713 = vsyncadd %s696, 0
          %s714 = smul.addr %s711, 4
          %s715 = scalar_lea.hbm %s3, %s714
          %s716 = sshll.u32 %s699, 4
          %s717 = int_to_ptr.vmem [resolvable:$true] %s716
          %s718 = sshll.u32 %s715, 4
          %s719 = int_to_ptr.hbm [resolvable:$true] %s718
          %724 = dma.vmem_to_hbm [thread:$0]  %s717, 512, %s719, %s696, 64, 64, 4
        $region36: #{tpu_custom_call.1} parent=31 // pred_fallthru
          _
        // Predicated region
        $region37: #{tpu_custom_call.1} parent=31 // pred_check
          %p725 = pneg %p135
        $region38: #{tpu_custom_call.1} parent=31 // pred_check_branch
          %727 = sbr.rel (%p725) target = $region40
        $region39: #{tpu_custom_call.1} parent=31 // pred_region
          %729 = vsyncadd %s701, 0
          %s730 = scalar_lea.hbm %s4, %s23
          %s732 = sshll.u32 %s703, 4
          %s733 = int_to_ptr.vmem [resolvable:$true] %s732
          %s734 = sshll.u32 %s730, 4
          %s735 = int_to_ptr.hbm [resolvable:$true] %s734
          %737 = dma.vmem_to_hbm [thread:$0]  %s733, 16, %s735, %s701
        $region40: #{tpu_custom_call.1} parent=31 // pred_fallthru
          _
        // Predicated region
        $region41: #{tpu_custom_call.1} parent=31 // pred_check
          %p738 = pneg %p161
        $region42: #{tpu_custom_call.1} parent=31 // pred_check_branch
          %740 = sbr.rel (%p738) target = $region44
        $region43: #{tpu_custom_call.1} parent=31 // pred_region
          %742 = vsyncadd %s705, 0
          %s743 = scalar_lea.hbm %s5, %s23
          %s745 = sshll.u32 %s707, 4
          %s746 = int_to_ptr.vmem [resolvable:$true] %s745
          %s747 = sshll.u32 %s743, 4
          %s748 = int_to_ptr.hbm [resolvable:$true] %s747
          %750 = dma.vmem_to_hbm [thread:$0]  %s746, 16, %s748, %s705
        $region44: #{tpu_custom_call.1} parent=31 // pred_fallthru
          _
      $region32: #{tpu_custom_call.1} parent=5 // pred_fallthru
        _
      %p751 = scmp.le.s32.totalorder 2, %s18
      // Predicated region
      $region45: #{tpu_custom_call.1} parent=5 // pred_check
        %p752 = pneg %p751
      $region46: #{tpu_custom_call.1} parent=5 // pred_check_branch
        %754 = sbr.rel (%p752) target = $region48
      $region47: #{tpu_custom_call.1} parent=5 // pred_region
        %s755 = ssub.s32 %s18, 2
        // Predicated region
        $region49: #{tpu_custom_call.1} parent=47 // pred_check
          %p756 = pneg %p115
        $region50: #{tpu_custom_call.1} parent=47 // pred_check_branch
          %758 = sbr.rel (%p756) target = $region52
        $region51: #{tpu_custom_call.1} parent=47 // pred_region
          %s759 = sand.u32 %s100, 1
          %s760 = scalar_lea.sflag [#allocation3], %s759
          %s761 = sand.u32 %s100, 1
          %s762 = smul.addr %s761, 32
          %s763 = scalar_lea.vmem [#allocation2], %s762
          %765 = dma.done %s760, 512
        $region52: #{tpu_custom_call.1} parent=47 // pred_fallthru
          _
        // Predicated region
        $region53: #{tpu_custom_call.1} parent=47 // pred_check
          %p766 = pneg %p141
        $region54: #{tpu_custom_call.1} parent=47 // pred_check_branch
          %768 = sbr.rel (%p766) target = $region56
        $region55: #{tpu_custom_call.1} parent=47 // pred_region
          %s769 = sand.u32 %s24, 1
          %s770 = scalar_lea.sflag [#allocation5], %s769
          %s771 = sand.u32 %s126, 1
          %s772 = scalar_lea.vmem [#allocation4], %s771
          %774 = dma.done %s770, 16
        $region56: #{tpu_custom_call.1} parent=47 // pred_fallthru
          _
        // Predicated region
        $region57: #{tpu_custom_call.1} parent=47 // pred_check
          %p775 = pneg %p167
        $region58: #{tpu_custom_call.1} parent=47 // pred_check_branch
          %777 = sbr.rel (%p775) target = $region60
        $region59: #{tpu_custom_call.1} parent=47 // pred_region
          %s778 = sand.u32 %s24, 1
          %s779 = scalar_lea.sflag [#allocation5], %s778
          %s780 = sand.u32 %s152, 1
          %s781 = scalar_lea.vmem [#allocation6], %s780
          %783 = dma.done %s779, 16
        $region60: #{tpu_custom_call.1} parent=47 // pred_fallthru
          _
      $region48: #{tpu_custom_call.1} parent=5 // pred_fallthru
        _
    $region6: #{tpu_custom_call.1} parent=1 // loop_footer
      %s22 = sadd.s32 1, %s18
    $region7: #{tpu_custom_call.1} parent=1 // loop_footer_branch
      %17 = sbr.rel target = $region3
    $region8: #{tpu_custom_call.1} parent=1 // loop_exit
      _
    %784 = vsyncpa [#allocation3], 1
    %s785 = scalar_lea.sflag [#allocation3], 1
    %786 = vsyncpa %s785, 1
    %787 = vsyncpa [#allocation5], 1
    %s788 = scalar_lea.sflag [#allocation5], 1
    %789 = vsyncpa %s788, 1

</llo_original>
